<compile_context>
chip_gen: v7x
topology: tpu7x:2x2x1
jax: 0.10.0
libtpu: 0.0.40
codegen_flags: <defaults>
</compile_context>

<pallas_src>
import numpy as np
import jax
import jax.numpy as jnp
from jax import lax
from jax.experimental import pallas as pl
from jax.experimental.pallas import tpu as pltpu

SHIFT = 1
REDUCE = 2


def _round_up(x, m):
    return (x + m - 1) // m * m


def _pad_gate_cols(w, h, hp, n_gates):
    """(K, n_gates*h) -> (K, n_gates*hp); gate g's columns land at [g*hp, g*hp+h)."""
    k = w.shape[0]
    out = jnp.zeros((k, n_gates * hp), w.dtype)
    for g in range(n_gates):
        out = out.at[:, g * hp:g * hp + h].set(w[:, g * h:(g + 1) * h])
    return out


def init_params(key, emb_size, hidden_size):
    ks = jax.random.split(key, 6)
    scale = 0.1
    # Leaf: Wc, Wo packed as (E, 2H); biases packed as (1, 2H)
    leaf_w = scale * jax.random.normal(ks[0], (emb_size, 2 * hidden_size), jnp.float32)
    leaf_b = scale * jax.random.normal(ks[1], (1, 2 * hidden_size), jnp.float32)
    # Composer: left/right weights for (i, lf, rf, u) packed as (H, 4H); biases summed into (1, 4H)
    comp_wl = scale * jax.random.normal(ks[2], (hidden_size, 4 * hidden_size), jnp.float32)
    comp_wr = scale * jax.random.normal(ks[3], (hidden_size, 4 * hidden_size), jnp.float32)
    comp_b = scale * (jax.random.normal(ks[4], (1, 4 * hidden_size), jnp.float32)
                      + jax.random.normal(ks[5], (1, 4 * hidden_size), jnp.float32))
    return dict(leaf_w=leaf_w, leaf_b=leaf_b,
                comp_wl=comp_wl, comp_wr=comp_wr, comp_b=comp_b)


# --------------------------------------------------------------------------- #
#              host-side ASAP (level-order) shift/reduce scheduling            #
# --------------------------------------------------------------------------- #

def _plan_asap_schedule(transitions, seqL, batch, nnodes):
    """Pure integer bookkeeping: pack every dependency-ready reduce into the same step."""
    transL = transitions.shape[0]
    buf_ptr = [seqL] * batch               # buffer pops from the tail
    next_id = [seqL] * batch               # composed-node ids start after leaves
    level = [dict() for _ in range(batch)]  # node id -> level (leaves = 0)
    stacks = [[] for _ in range(batch)]
    stack_out = [[] for _ in range(batch)]
    reduces = []                           # (level, b, left, right, out)
    for i in range(transL):
        for b in range(batch):
            t = int(transitions[i, b])
            if t == SHIFT:
                buf_ptr[b] -= 1
                assert buf_ptr[b] >= 0, "too many SHIFTs for buffer"
                stacks[b].append(buf_ptr[b])
                stack_out[b].append(buf_ptr[b])
            elif t == REDUCE:
                assert len(stacks[b]) >= 2, "REDUCE with fewer than 2 stack items"
                r = stacks[b].pop()
                l = stacks[b].pop()
                new = next_id[b]
                next_id[b] += 1
                assert 0 <= l < nnodes and 0 <= r < nnodes and 0 <= new < nnodes
                lvl = max(level[b].get(l, 0), level[b].get(r, 0)) + 1
                level[b][new] = lvl
                reduces.append((lvl, b, l, r, new))
                stacks[b].append(new)
                stack_out[b].append(new)

    max_level = max((lvl for lvl, *_ in reduces), default=0)
    n_steps = max(1, max_level)
    per_level = [[] for _ in range(n_steps)]
    for lvl, b, l, r, o in reduces:
        per_level[lvl - 1].append((b, l, r, o))
    max_rows = max(len(v) for v in per_level)
    r_pad = _round_up(max(max_rows, 1), 8)

    lrow = np.zeros((n_steps, r_pad), np.int32)
    rrow = np.zeros((n_steps, r_pad), np.int32)
    orow = np.zeros((n_steps, r_pad), np.int32)
    rmask = np.zeros((n_steps, r_pad), np.int32)
    for s, rows in enumerate(per_level):
        for j, (b, l, r, o) in enumerate(rows):
            lrow[s, j] = b * nnodes + l
            rrow[s, j] = b * nnodes + r
            orow[s, j] = b * nnodes + o
            rmask[s, j] = 1
    return (lrow.reshape(-1), rrow.reshape(-1), orow.reshape(-1), rmask.reshape(-1),
            n_steps, r_pad, stacks, stack_out)


# --------------------------------------------------------------------------- #
#                           SPINN forward (Pallas)                             #
# --------------------------------------------------------------------------- #

def spinn_tree_lstm_forward(seq_embs, transitions, params, hidden_size):
    """
    seq_embs    : jnp.float32 (seqL, batch, emb)
    transitions : np.int32    (transL, batch) -- concrete host data (data-dependent control)
    returns (outputs, (h_states, c_states)) matching the PyTorch module.
    """
    seq_embs = jnp.asarray(seq_embs, jnp.float32)
    transitions = np.asarray(transitions)
    seqL, batch, emb = seq_embs.shape
    H = hidden_size
    Hp = _round_up(H, 128)                 # lane-dense padded hidden size
    NNODES = 2 * seqL - 1                  # max nodes per batch element (leaves + reduces)
    total_rows = batch * NNODES
    TILE = 256 if total_rows >= 256 else _round_up(total_rows, 16)
    total_pad = _round_up(total_rows, TILE)

    # ---------------- host-side ASAP schedule + extraction bookkeeping ----------------
    (lrow_np, rrow_np, orow_np, rmask_np,
     n_steps, R_pad, stacks_sym, stack_out_sym) = _plan_asap_schedule(
        transitions, seqL, batch, NNODES)
    lrow = jnp.asarray(lrow_np)
    rrow = jnp.asarray(rrow_np)
    orow = jnp.asarray(orow_np)
    rmask = jnp.asarray(rmask_np)

    # ---------------- device-side operand preparation (done once) ----------------
    # Leaf embeddings laid out in node-row order: row b*NNODES + t = seq_embs[t, b].
    x_nodes = jnp.zeros((total_pad, emb), jnp.bfloat16)
    x_nodes = x_nodes.at[:total_rows].set(
        jnp.pad(jnp.transpose(seq_embs, (1, 0, 2)),
                ((0, 0), (0, NNODES - seqL), (0, 0)))
        .reshape(total_rows, emb).astype(jnp.bfloat16))

    # Lane-padded weights; bf16 matmul operands, f32 biases. Gate g -> columns [g*Hp, g*Hp+H).
    leaf_w = _pad_gate_cols(params["leaf_w"], H, Hp, 2).astype(jnp.bfloat16)      # (E, 2Hp)
    leaf_b = _pad_gate_cols(params["leaf_b"], H, Hp, 2)                           # (1, 2Hp)
    comp_w = jnp.zeros((2 * Hp, 4 * Hp), jnp.float32)
    comp_w = comp_w.at[0:H, :].set(_pad_gate_cols(params["comp_wl"], H, Hp, 4))   # lh rows
    comp_w = comp_w.at[Hp:Hp + H, :].set(_pad_gate_cols(params["comp_wr"], H, Hp, 4))  # rh rows
    comp_w = comp_w.astype(jnp.bfloat16)                                          # (2Hp, 4Hp)
    comp_b = _pad_gate_cols(params["comp_b"], H, Hp, 4)                           # (1, 4Hp)

    # ------------------------- kernel 1: tiled leaf projection -------------------------
    def leaf_kernel(x_ref, w_ref, b_ref, h_ref, c_ref):
        x = x_ref[...]                                                 # bf16 tile
        pre = jnp.dot(x, w_ref[...], preferred_element_type=jnp.float32) + b_ref[...]
        c = pre[:, :Hp]                        # c = Wc x + bc (no activation)
        o = jax.nn.sigmoid(pre[:, Hp:])        # o = sigmoid(Wo x + bo)
        h_ref[...] = o * jnp.tanh(c)
        c_ref[...] = c

    num_tiles = total_pad // TILE
    h_leaf, c_leaf = pl.pallas_call(
        leaf_kernel,
        out_shape=(jax.ShapeDtypeStruct((total_pad, Hp), jnp.float32),
                   jax.ShapeDtypeStruct((total_pad, Hp), jnp.float32)),
        grid=(num_tiles,),
        in_specs=[
            pl.BlockSpec((TILE, emb), lambda i: (i, 0)),
            pl.BlockSpec((emb, 2 * Hp), lambda i: (0, 0)),
            pl.BlockSpec((1, 2 * Hp), lambda i: (0, 0)),
        ],
        out_specs=(
            pl.BlockSpec((TILE, Hp), lambda i: (i, 0)),
            pl.BlockSpec((TILE, Hp), lambda i: (i, 0)),
        ),
        compiler_params=pltpu.CompilerParams(dimension_semantics=("parallel",)),
    )(x_nodes, leaf_w, leaf_b)

    # ------------------- kernel 2: gridless composer (in-kernel step loop) -------------------
    def composer_kernel(lrow_ref, rrow_ref, orow_ref, mask_ref,        # SMEM schedule tables
                        cw_ref, cb_ref, h_in_ref, c_in_ref,            # VMEM inputs (resident)
                        h_tab_ref, c_tab_ref,                          # VMEM outputs (node tables)
                        lhs_ref, lc_ref, rc_ref, hres_ref, cres_ref):  # VMEM scratch
        # Node tables become the kernel-resident working state (aliased to the leaf tables).
        h_tab_ref[...] = h_in_ref[...]
        c_tab_ref[...] = c_in_ref[...]
        lhs_ref[...] = jnp.zeros_like(lhs_ref)
        lc_ref[...] = jnp.zeros_like(lc_ref)
        rc_ref[...] = jnp.zeros_like(rc_ref)

        def step_body(s, carry):
            base = s * R_pad

            # ---- masked gather: left h -> lhs[:, :Hp], right h -> lhs[:, Hp:], c's aside ----
            def gather_body(r, c2):
                idx = base + r

                @pl.when(mask_ref[idx] == 1)
                def _():
                    li = lrow_ref[idx]
                    ri = rrow_ref[idx]
                    lhs_ref[pl.ds(r, 1), pl.ds(0, Hp)] = h_tab_ref[pl.ds(li, 1), :]
                    lhs_ref[pl.ds(r, 1), pl.ds(Hp, Hp)] = h_tab_ref[pl.ds(ri, 1), :]
                    lc_ref[pl.ds(r, 1), :] = c_tab_ref[pl.ds(li, 1), :]
                    rc_ref[pl.ds(r, 1), :] = c_tab_ref[pl.ds(ri, 1), :]
                return c2

            lax.fori_loop(0, R_pad, gather_body, 0)

            # ---- fused composer: one matmul, gates at 128-lane-aligned offsets ----
            gates = jnp.dot(lhs_ref[...].astype(jnp.bfloat16), cw_ref[...],
                            preferred_element_type=jnp.float32) + cb_ref[...]
            ig = jax.nn.sigmoid(gates[:, 0 * Hp:1 * Hp])
            lf = jax.nn.sigmoid(gates[:, 1 * Hp:2 * Hp])
            rf = jax.nn.sigmoid(gates[:, 2 * Hp:3 * Hp])
            u = jnp.tanh(gates[:, 3 * Hp:4 * Hp])
            c_new = ig * u + lf * lc_ref[...] + rf * rc_ref[...]
            cres_ref[...] = c_new
            hres_ref[...] = jnp.tanh(c_new)

            # ---- masked scatter of composed h/c rows into the node tables ----
            def scatter_body(r, c2):
                idx = base + r

                @pl.when(mask_ref[idx] == 1)
                def _():
                    oi = orow_ref[idx]
                    h_tab_ref[pl.ds(oi, 1), :] = hres_ref[pl.ds(r, 1), :]
                    c_tab_ref[pl.ds(oi, 1), :] = cres_ref[pl.ds(r, 1), :]
                return c2

            lax.fori_loop(0, R_pad, scatter_body, 0)
            return carry

        lax.fori_loop(0, n_steps, step_body, 0)

    # VMEM budget for the composer's resident set (tables in+out, weights, scratch) + headroom.
    tab_bytes = total_pad * Hp * 4
    resident = 4 * tab_bytes                                   # h/c tables, in + out copies
    resident += (2 * Hp) * (4 * Hp) * 2 + (4 * Hp) * 4         # comp_w (bf16) + comp_b (f32)
    resident += R_pad * Hp * 4 * 6                             # lhs(2) + lc + rc + hres + cres
    vmem_limit = int(min(48 * 2 ** 20, max(16 * 2 ** 20, 2 * resident)))

    h_tab, c_tab = pl.pallas_call(
        composer_kernel,
        out_shape=(jax.ShapeDtypeStruct((total_pad, Hp), jnp.float32),
                   jax.ShapeDtypeStruct((total_pad, Hp), jnp.float32)),
        in_specs=[
            pl.BlockSpec(memory_space=pltpu.MemorySpace.SMEM),   # lrow
            pl.BlockSpec(memory_space=pltpu.MemorySpace.SMEM),   # rrow
            pl.BlockSpec(memory_space=pltpu.MemorySpace.SMEM),   # orow
            pl.BlockSpec(memory_space=pltpu.MemorySpace.SMEM),   # rmask
            pl.BlockSpec(memory_space=pltpu.MemorySpace.VMEM),   # comp_w
            pl.BlockSpec(memory_space=pltpu.MemorySpace.VMEM),   # comp_b
            pl.BlockSpec(memory_space=pltpu.MemorySpace.VMEM),   # h_leaf
            pl.BlockSpec(memory_space=pltpu.MemorySpace.VMEM),   # c_leaf
        ],
        out_specs=(
            pl.BlockSpec(memory_space=pltpu.MemorySpace.VMEM),
            pl.BlockSpec(memory_space=pltpu.MemorySpace.VMEM),
        ),
        scratch_shapes=[
            pltpu.VMEM((R_pad, 2 * Hp), jnp.float32),   # lhs = [lh | rh]
            pltpu.VMEM((R_pad, Hp), jnp.float32),       # lc
            pltpu.VMEM((R_pad, Hp), jnp.float32),       # rc
            pltpu.VMEM((R_pad, Hp), jnp.float32),       # h result staging
            pltpu.VMEM((R_pad, Hp), jnp.float32),       # c result staging
        ],
        input_output_aliases={6: 0, 7: 1},              # leaf tables become the node tables
        compiler_params=pltpu.CompilerParams(vmem_limit_bytes=vmem_limit),
    )(lrow, rrow, orow, rmask, comp_w, comp_b, h_leaf, c_leaf)

    # ---------------- result extraction (a few batched gathers, host bookkeeping) ----------------
    root_rows = []
    for b in range(batch):
        assert len(stacks_sym[b]) == 1, "transitions do not reduce to a single root"
        root_rows.append(b * NNODES + stacks_sym[b][0])
    root_rows = jnp.asarray(np.array(root_rows, np.int32))
    h_states = jnp.take(h_tab, root_rows, axis=0)[:, :H]
    c_states = jnp.take(c_tab, root_rows, axis=0)[:, :H]

    outputs = []
    for b in range(batch):
        ids = list(reversed(stack_out_sym[b]))          # popped tail-to-head
        if ids:
            rows = jnp.asarray(np.array([b * NNODES + k for k in ids], np.int32))
            h_all = jnp.take(h_tab, rows, axis=0)[:, :H]   # single gather per batch element
            outputs.append([h_all[j:j + 1] for j in range(len(ids))])
        else:
            outputs.append([])

    return outputs, (h_states, c_states)


# --------------------------------------------------------------------------- #
#                      pure-jnp reference (PyTorch semantics)                  #
# --------------------------------------------------------------------------- #

def _reference_forward(seq_embs, transitions, params, H):
    def bf16(x):
        return x.astype(jnp.bfloat16).astype(jnp.float32)   # mirror MXU operand rounding

    seqL, batch, emb = seq_embs.shape
    x = seq_embs.reshape(seqL * batch, emb)
    pre = jnp.dot(bf16(x), bf16(params["leaf_w"])) + params["leaf_b"]
    c = pre[:, :H]
    o = jax.nn.sigmoid(pre[:, H:])
    h = o * jnp.tanh(c)
    leaf_states = jnp.concatenate([h, c], -1).reshape(seqL, batch, 2 * H).transpose(1, 0, 2)

    buffers = [[leaf_states[b, t:t + 1] for t in range(seqL)] for b in range(batch)]
    stacks = [[] for _ in range(batch)]
    stack_outputs = [[] for _ in range(batch)]
    for i in range(transitions.shape[0]):
        for b in range(batch):
            t = int(transitions[i, b])
            if t == SHIFT:
                stacks[b].append(buffers[b].pop())
                stack_outputs[b].append(stacks[b][-1])
            elif t == REDUCE:
                right = stacks[b].pop()
                left = stacks[b].pop()
                lh, lc = left[:, :H], left[:, H:]
                rh, rc = right[:, :H], right[:, H:]
                gates = (jnp.dot(bf16(lh), bf16(params["comp_wl"]))
                         + jnp.dot(bf16(rh), bf16(params["comp_wr"])) + params["comp_b"])
                ig = jax.nn.sigmoid(gates[:, :H])
                lf = jax.nn.sigmoid(gates[:, H:2 * H])
                rf = jax.nn.sigmoid(gates[:, 2 * H:3 * H])
                u = jnp.tanh(gates[:, 3 * H:])
                cc = ig * u + lf * lc + rf * rc
                hh = jnp.tanh(cc)
                nd = jnp.concatenate([hh, cc], -1)
                stacks[b].append(nd)
                stack_outputs[b].append(nd)
    h_states = jnp.concatenate([s[0][:, :H] for s in stacks], 0)
    c_states = jnp.concatenate([s[0][:, H:] for s in stacks], 0)
    outputs = []
    for b in range(batch):
        out = []
        so = list(stack_outputs[b])
        while so:
            out.append(so.pop()[:, :H])
        outputs.append(out)
    return outputs, (h_states, c_states)


# ----------------------------------- main ----------------------------------- #

if __name__ == "__main__":
    emb_size = 32
    hidden_size = 32
    seqL = 8
    batch = 2

    key = jax.random.PRNGKey(0)
    k_emb, k_param = jax.random.split(key)

    seq_embs = jax.random.normal(k_emb, (seqL, batch, emb_size), jnp.float32)
    params = init_params(k_param, emb_size, hidden_size)

    # Valid shift/reduce sequences, transL = 2*seqL - 1 = 15
    # batch element 0: left-branching   S S R (S R)*(seqL-2)
    t0 = [SHIFT, SHIFT, REDUCE]
    for _ in range(seqL - 2):
        t0 += [SHIFT, REDUCE]
    # batch element 1: all shifts, then all reduces
    t1 = [SHIFT] * seqL + [REDUCE] * (seqL - 1)
    assert len(t0) == len(t1) == 2 * seqL - 1
    transitions = np.stack([np.array(t0, np.int32), np.array(t1, np.int32)], axis=1)  # (transL, batch)

    outputs, (h_states, c_states) = spinn_tree_lstm_forward(
        seq_embs, transitions, params, hidden_size)

    jax.block_until_ready(h_states)
    jax.block_until_ready(c_states)

    # shape checks
    assert h_states.shape == (batch, hidden_size)
    assert c_states.shape == (batch, hidden_size)
    assert all(len(out) == 2 * seqL - 1 for out in outputs)
    assert all(o.shape == (1, hidden_size) for out in outputs for o in out)

    # numerical check against a pure-jnp reference of the PyTorch module
    ref_outputs, (ref_h, ref_c) = _reference_forward(seq_embs, transitions, params, hidden_size)
    np.testing.assert_allclose(np.asarray(h_states), np.asarray(ref_h), atol=2e-2, rtol=2e-2)
    np.testing.assert_allclose(np.asarray(c_states), np.asarray(ref_c), atol=2e-2, rtol=2e-2)
    for out, rout in zip(outputs, ref_outputs):
        for a, r in zip(out, rout):
            np.testing.assert_allclose(np.asarray(a), np.asarray(r), atol=2e-2, rtol=2e-2)

    print("KERNEL_OK")
</pallas_src>

<mosaic_0001>
module attributes {stable_mosaic.version = 11 : i64} {
  func.func @leaf_kernel(%arg0: i32, %arg1: memref<32x32xbf16, #tpu.memory_space<vmem>>, %arg2: memref<32x256xbf16, #tpu.memory_space<vmem>>, %arg3: memref<1x256xf32, #tpu.memory_space<vmem>>, %arg4: memref<32x128xf32, #tpu.memory_space<vmem>>, %arg5: memref<32x128xf32, #tpu.memory_space<vmem>>) attributes {dimension_semantics = [#tpu.dimension_semantics<parallel>], iteration_bounds = array<i64: 1>, scalar_prefetch = 0 : i64, scratch_operands = 0 : i64, tpu.core_type = #tpu.core_type<tc>, window_params = [{transform_indices = @transform_0, window_bounds = array<i64: 32, 32>}, {pipeline_mode = #tpu.pipeline_mode<synchronous>, transform_indices = @transform_1, window_bounds = array<i64: 32, 256>}, {pipeline_mode = #tpu.pipeline_mode<synchronous>, transform_indices = @transform_2, window_bounds = array<i64: 1, 256>}, {transform_indices = @transform_3, window_bounds = array<i64: 32, 128>}, {transform_indices = @transform_4, window_bounds = array<i64: 32, 128>}]} {
    %c0 = arith.constant 0 : index
    %c0_0 = arith.constant 0 : index
    %0 = vector.load %arg1[%c0, %c0_0] : memref<32x32xbf16, #tpu.memory_space<vmem>>, vector<32x32xbf16>
    %c0_1 = arith.constant 0 : index
    %c0_2 = arith.constant 0 : index
    %1 = vector.load %arg2[%c0_1, %c0_2] : memref<32x256xbf16, #tpu.memory_space<vmem>>, vector<32x256xbf16>
    %cst = arith.constant dense<0.000000e+00> : vector<32x256xf32>
    %2 = tpu.matmul %0, %1, %cst {dimension_numbers = #tpu.dot_dimension_numbers<[1], [0], [0], [1], [0, 0, 1, 1], [], []>} : vector<32x32xbf16>, vector<32x256xbf16>, vector<32x256xf32> -> vector<32x256xf32>
    %c0_3 = arith.constant 0 : index
    %c0_4 = arith.constant 0 : index
    %3 = vector.load %arg3[%c0_3, %c0_4] : memref<1x256xf32, #tpu.memory_space<vmem>>, vector<1x256xf32>
    %4 = vector.broadcast %3 : vector<1x256xf32> to vector<32x256xf32>
    %5 = arith.addf %2, %4 : vector<32x256xf32>
    %6 = vector.extract_strided_slice %5 {offsets = [0, 0], sizes = [32, 128], strides = [1, 1]} : vector<32x256xf32> to vector<32x128xf32>
    %7 = vector.extract_strided_slice %5 {offsets = [0, 128], sizes = [32, 128], strides = [1, 1]} : vector<32x256xf32> to vector<32x128xf32>
    %8 = arith.negf %7 : vector<32x128xf32>
    %9 = math.exp %8 : vector<32x128xf32>
    %cst_5 = arith.constant 1.000000e+00 : f32
    %10 = vector.broadcast %cst_5 : f32 to vector<32x128xf32>
    %11 = arith.addf %10, %9 : vector<32x128xf32>
    %12 = arith.divf %10, %11 : vector<32x128xf32>
    %13 = math.tanh %6 : vector<32x128xf32>
    %14 = arith.mulf %12, %13 : vector<32x128xf32>
    %c0_6 = arith.constant 0 : index
    %c0_7 = arith.constant 0 : index
    %15 = vector.load %arg4[%c0_6, %c0_7] : memref<32x128xf32, #tpu.memory_space<vmem>>, vector<32x128xf32>
    tpu.vector_store %arg4[%c0_6, %c0_7], %14 {strides = array<i32>} : memref<32x128xf32, #tpu.memory_space<vmem>>, vector<32x128xf32>,
    %c0_8 = arith.constant 0 : index
    %c0_9 = arith.constant 0 : index
    %16 = vector.load %arg5[%c0_8, %c0_9] : memref<32x128xf32, #tpu.memory_space<vmem>>, vector<32x128xf32>
    tpu.vector_store %arg5[%c0_8, %c0_9], %6 {strides = array<i32>} : memref<32x128xf32, #tpu.memory_space<vmem>>, vector<32x128xf32>,
    return
  }
  func.func @transform_0(%arg0: i32) -> (i32, i32) {
    %c0_i32 = arith.constant 0 : i32
    %c0_i32_0 = arith.constant 0 : i32
    return %arg0, %c0_i32 : i32, i32
  }
  func.func @transform_1(%arg0: i32) -> (i32, i32) {
    %c0_i32 = arith.constant 0 : i32
    %c0_i32_0 = arith.constant 0 : i32
    %c0_i32_1 = arith.constant 0 : i32
    return %c0_i32, %c0_i32_0 : i32, i32
  }
  func.func @transform_2(%arg0: i32) -> (i32, i32) {
    %c0_i32 = arith.constant 0 : i32
    %c0_i32_0 = arith.constant 0 : i32
    %c0_i32_1 = arith.constant 0 : i32
    return %c0_i32, %c0_i32_0 : i32, i32
  }
  func.func @transform_3(%arg0: i32) -> (i32, i32) {
    %c0_i32 = arith.constant 0 : i32
    %c0_i32_0 = arith.constant 0 : i32
    return %arg0, %c0_i32 : i32, i32
  }
  func.func @transform_4(%arg0: i32) -> (i32, i32) {
    %c0_i32 = arith.constant 0 : i32
    %c0_i32_0 = arith.constant 0 : i32
    return %arg0, %c0_i32 : i32, i32
  }
}

</mosaic_0001>

<llo_original>
// kernel: tpu_custom_call.1
$region0: #{tpu_custom_call.1}
  #allocation0 [shape = 'u32[]', space=smem, size = 0x4, offset = 0x4, fixed_abs, tag = 'smem constant byte address 0x4 - core index']
  #allocation1 [shape = 'u32[144,128]{1,0:T(1,128)}', space=vmem, size = 0x12000, scoped, tag = 'internal scratch']
  %s0 = inlined_call_operand.hbm [shape: bf16[32,32], index: 0, kind: input, shape index: {}]
  %s1 = inlined_call_operand.hbm [shape: bf16[32,256], index: 1, kind: input, shape index: {}]
  %s2 = inlined_call_operand.vmem [shape: f32[1,256], index: 2, kind: input, shape index: {}]
  %s3 = inlined_call_operand.hbm [shape: f32[32,128], index: 3, kind: output, shape index: {0}]
  %s4 = inlined_call_operand.hbm [shape: f32[32,128], index: 4, kind: output, shape index: {1}]
  %5 = xla_tuple %s3, %s4
  %s6 = sld [smem:[#allocation0]]
  $region38: #{tpu_custom_call.1} parent=0
    _
  %s8 = ssub.s32 1, %s6
  %s9 = scalar_select 0, %s8, %s6
  $region1: #{tpu_custom_call.1} parent=0
    #allocation2 [shape = 'u8[8192]{0}', space=vmem, size = 0x2000, scoped, tag = 'input window, operand 0, single buffered']
    #allocation3 [shape = 's32[1]{0}', space=sflag, size = 0x4, scoped, tag = 'scoped memory for tpu_custom_call.1']
    #allocation4 [shape = 's32[1]{0}', space=sflag, size = 0x4, scoped, tag = 'scoped memory for tpu_custom_call.1']
    #allocation5 [shape = 'u8[16384]{0}', space=vmem, size = 0x4000, scoped, tag = 'input window, operand 1, single buffered']
    #allocation6 [shape = 's32[1]{0}', space=sflag, size = 0x4, scoped, tag = 'scoped memory for tpu_custom_call.1']
    #allocation7 [shape = 'u8[16384]{0}', space=vmem, size = 0x4000, scoped, tag = 'output window, operand 0, single buffered']
    #allocation8 [shape = 'u8[16384]{0}', space=vmem, size = 0x4000, scoped, tag = 'output window, operand 1, single buffered']
    #allocation9 [shape = 's32[1]{0}', space=sflag, size = 0x4, scoped, tag = 'scoped memory for tpu_custom_call.1']
    %10 = vsyncpa [#allocation3], 0
    %11 = vsyncpa [#allocation6], 0
    %12 = vsyncpa [#allocation4], 0
    %13 = vsyncpa [#allocation9], 0
    // Predicated region
    $region2: #{tpu_custom_call.1} parent=1 // pred_check
      _
    $region3: #{tpu_custom_call.1} parent=1 // pred_check_branch
      %15 = sbr.rel (0) target = $region5
    $region4: #{tpu_custom_call.1} parent=1 // pred_region
      %s17 = ssub.s32 256, 256
      %18 = vsyncadd [#allocation3], %s17
      %s19 = sshll.u32 [#allocation2], 4
      %s20 = int_to_ptr.vmem [resolvable:$true] %s19
      %25 = dma.hbm_to_vmem [thread:$0]  %s0, 256, %s20, [#allocation3], 64, 64, 4
    $region5: #{tpu_custom_call.1} parent=1 // pred_fallthru
      _
    // Predicated region
    $region6: #{tpu_custom_call.1} parent=1 // pred_check
      _
    $region7: #{tpu_custom_call.1} parent=1 // pred_check_branch
      %27 = sbr.rel (0) target = $region9
    $region8: #{tpu_custom_call.1} parent=1 // pred_region
      %s29 = ssub.s32 512, 512
      %30 = vsyncadd [#allocation6], %s29
      %s31 = sshll.u32 [#allocation5], 4
      %s32 = int_to_ptr.vmem [resolvable:$true] %s31
      %37 = dma.hbm_to_vmem [thread:$0]  %s1, 512, %s32, [#allocation6], 128, 128, 8
    $region9: #{tpu_custom_call.1} parent=1 // pred_fallthru
      _
    // Predicated region
    $region10: #{tpu_custom_call.1} parent=1 // pred_check
      _
    $region11: #{tpu_custom_call.1} parent=1 // pred_check_branch
      %39 = sbr.rel (0) target = $region13
    $region12: #{tpu_custom_call.1} parent=1 // pred_region
      _
    $region13: #{tpu_custom_call.1} parent=1 // pred_fallthru
      _
    // Predicated region
    $region14: #{tpu_custom_call.1} parent=1 // pred_check
      _
    $region15: #{tpu_custom_call.1} parent=1 // pred_check_branch
      %41 = sbr.rel (0) target = $region17
    $region16: #{tpu_custom_call.1} parent=1 // pred_region
      %42 = dma.done [#allocation3], 256
    $region17: #{tpu_custom_call.1} parent=1 // pred_fallthru
      _
    // Predicated region
    $region18: #{tpu_custom_call.1} parent=1 // pred_check
      _
    $region19: #{tpu_custom_call.1} parent=1 // pred_check_branch
      %44 = sbr.rel (0) target = $region21
    $region20: #{tpu_custom_call.1} parent=1 // pred_region
      %45 = dma.done [#allocation6], 512
    $region21: #{tpu_custom_call.1} parent=1 // pred_fallthru
      _
    %v47 = vld [vmem:[#allocation2] sm:$0xf]
    %v48 = vld [vmem:[#allocation2 + $0x4] sm:$0xf]
    %v49 = vld [vmem:[#allocation2 + $0x8] sm:$0xf]
    %v50 = vld [vmem:[#allocation2 + $0xc] sm:$0xf]
    %v51 = vld [vmem:[#allocation5] sm:$0xff]
    %v52 = vld [vmem:[#allocation5 + $0x8] sm:$0xff]
    %v53 = vld [vmem:[#allocation5 + $0x10] sm:$0xff]
    %v54 = vld [vmem:[#allocation5 + $0x18] sm:$0xff]
    %v55 = vld [vmem:[%s2] sm:$0x3]
    %v57 = vlaneseq
    %v58 = vshrl.u32 %v57, 7
    %v59 = vsub.s32 0, %v58
    %v60 = vrot.slane %v55, %v59
    %v61 = vlaneseq
    %v62 = vshrl.u32 %v61, 7
    %v63 = vsub.s32 1, %v62
    %v64 = vrot.slane %v55, %v63
    %v71 = vunpack.c.l.b16 %v47
    %v72 = vunpack.c.l.b16 %v48
    %v73 = vunpack.c.l.b16 %v49
    %v74 = vunpack.c.l.b16 %v50
    %v75 = vpack.c.b16 %v72, %v71
    %v76 = vpack.c.b16 %v74, %v73
    %v81 = vunpack.c.l.b16 %v51
    %v82 = vunpack.c.h.b16 %v51
    %v83 = vunpack.c.l.b16 %v52
    %v84 = vunpack.c.h.b16 %v52
    %v85 = vunpack.c.l.b16 %v53
    %v86 = vunpack.c.h.b16 %v53
    %v87 = vunpack.c.l.b16 %v54
    %v88 = vunpack.c.h.b16 %v54
    %v89 = vpack.c.b16 %v83, %v81
    %v90 = vpack.c.b16 %v84, %v82
    %v91 = vpack.c.b16 %v87, %v85
    %v92 = vpack.c.b16 %v88, %v86
    %vm97 = vcmask 261120
    %v99 = vsel %vm97, %v75, 0
    %v102 = vsel %vm97, %v76, 0
    %104 = vmatprep.subr.bf16.mxu0 %v90
    %105 = vmatpush1.bf16.msra.mxu0 %v89
    %106 = vmatprep.subr.bf16.mxu0 %v92
    %107 = vmatpush1.bf16.msra.mxu0 %v91
    %108 = vmatprep.subr.bf16.mxu0 0
    %109 = vmatpush1.bf16.msra.mxu0 0
    %110 = vmatprep.subr.bf16.mxu0 0
    %111 = vmatpush1.bf16.msra.mxu0 0
    %112 = vmatprep.subr.bf16.mxu0 0
    %113 = vmatpush1.bf16.msra.mxu0 0
    %114 = vmatprep.subr.bf16.mxu0 0
    %115 = vmatpush1.bf16.msra.mxu0 0
    %116 = vmatprep.subr.bf16.mxu0 0
    %117 = vmatpush1.bf16.msra.mxu0 0
    %118 = vmatprep.subr.bf16.mxu0 0
    %119 = vmatpush1.bf16.msra.mxu0 0
    %120 = vmatprep.subr.bf16.mxu0 0
    %121 = vmatpush1.bf16.msra.mxu0 0
    %122 = vmatprep.subr.bf16.mxu0 0
    %123 = vmatpush1.bf16.msra.mxu0 0
    %124 = vmatprep.subr.bf16.mxu0 0
    %125 = vmatpush1.bf16.msra.mxu0 0
    %126 = vmatprep.subr.bf16.mxu0 0
    %127 = vmatpush1.bf16.msra.mxu0 0
    %128 = vmatprep.subr.bf16.mxu0 0
    %129 = vmatpush1.bf16.msra.mxu0 0
    %130 = vmatprep.subr.bf16.mxu0 0
    %131 = vmatpush1.bf16.msra.mxu0 0
    %132 = vmatprep.subr.bf16.mxu0 0
    %133 = vmatpush1.bf16.msra.mxu0 0
    %134 = vmatprep.subr.bf16.mxu0 0
    %135 = vmatpush1.bf16.msra.mxu0 0
    %136 = vmatprep.mubr.bf16.mxu0 0
    %137 = vmatmul.mubr.bf16.gmra.mrb[0].mxu0 %v99
    %v138 = vpop.f32.mrb[0].mxu0
    %v139 = vadd.f32 %v60, %v138
    %v140 = vpop.f32.mrb[0].mxu0
    %v141 = vadd.f32 %v64, %v140
    %v142 = vpop.f32.mrb[0].mxu0
    %v143 = vadd.f32 %v60, %v142
    %v144 = vpop.f32.mrb[0].mxu0
    %v145 = vadd.f32 %v64, %v144
    %146 = vmatprep.mubr.bf16.mxu0 0
    %147 = vmatmul.mubr.bf16.gmra.mrb[0].mxu0 %v102
    %v148 = vpop.f32.mrb[0].mxu0
    %v149 = vadd.f32 %v60, %v148
    %v150 = vpop.f32.mrb[0].mxu0
    %v151 = vadd.f32 %v64, %v150
    %v152 = vpop.f32.mrb[0].mxu0
    %v153 = vadd.f32 %v60, %v152
    %v154 = vpop.f32.mrb[0].mxu0
    %v155 = vadd.f32 %v64, %v154
    %156 = vdwg.mxu0
    %v157 = vxor.u32 %v141, 2147483648
    %v158 = vxor.u32 %v145, 2147483648
    %v159 = vxor.u32 %v151, 2147483648
    %v160 = vxor.u32 %v155, 2147483648
    %v161 = vmul.f32 %v157, 1.442695
    %v162 = vpow.pop %v161
    %v163 = vmul.f32 %v158, 1.442695
    %v164 = vpow.pop %v163
    %v165 = vmul.f32 %v159, 1.442695
    %v166 = vpow.pop %v165
    %v167 = vmul.f32 %v160, 1.442695
    %v168 = vpow.pop %v167
    %v169 = vadd.f32 %v162, 1.0
    %v170 = vadd.f32 %v164, 1.0
    %v171 = vadd.f32 %v166, 1.0
    %v172 = vadd.f32 %v168, 1.0
    %v173 = vrcp.pop %v169
    %v174 = vmul.f32 1.0, %v173
    %v175 = vrcp.pop %v170
    %v176 = vmul.f32 1.0, %v175
    %v177 = vrcp.pop %v171
    %v178 = vmul.f32 1.0, %v177
    %v179 = vrcp.pop %v172
    %v180 = vmul.f32 1.0, %v179
    %v181 = vtanh.pop %v139
    %v182 = vtanh.pop %v143
    %v183 = vtanh.pop %v149
    %v184 = vtanh.pop %v153
    %v185 = vmul.f32 %v174, %v181
    %v186 = vmul.f32 %v176, %v182
    %v187 = vmul.f32 %v178, %v183
    %v188 = vmul.f32 %v180, %v184
    %189 = vst [vmem:[#allocation7] sm:$0xff] %v185
    %190 = vst [vmem:[#allocation7 + $0x8] sm:$0xff] %v186
    %191 = vst [vmem:[#allocation7 + $0x10] sm:$0xff] %v187
    %192 = vst [vmem:[#allocation7 + $0x18] sm:$0xff] %v188
    %193 = vst [vmem:[#allocation8] sm:$0xff] %v139
    %194 = vst [vmem:[#allocation8 + $0x8] sm:$0xff] %v143
    %195 = vst [vmem:[#allocation8 + $0x10] sm:$0xff] %v149
    %196 = vst [vmem:[#allocation8 + $0x18] sm:$0xff] %v153
    // Predicated region
    $region22: #{tpu_custom_call.1} parent=1 // pred_check
      _
    $region23: #{tpu_custom_call.1} parent=1 // pred_check_branch
      %198 = sbr.rel (0) target = $region25
    $region24: #{tpu_custom_call.1} parent=1 // pred_region
      %s200 = ssub.s32 512, 512
      %201 = vsyncadd [#allocation4], %s200
      %s202 = sshll.u32 [#allocation7], 4
      %s203 = int_to_ptr.vmem [resolvable:$true] %s202
      %208 = dma.vmem_to_hbm [thread:$0]  %s203, 512, %s3, [#allocation4], 128, 128, 8
    $region25: #{tpu_custom_call.1} parent=1 // pred_fallthru
      _
    // Predicated region
    $region26: #{tpu_custom_call.1} parent=1 // pred_check
      _
    $region27: #{tpu_custom_call.1} parent=1 // pred_check_branch
      %210 = sbr.rel (0) target = $region29
    $region28: #{tpu_custom_call.1} parent=1 // pred_region
      %s212 = ssub.s32 512, 512
      %213 = vsyncadd [#allocation9], %s212
      %s214 = sshll.u32 [#allocation8], 4
      %s215 = int_to_ptr.vmem [resolvable:$true] %s214
      %220 = dma.vmem_to_hbm [thread:$0]  %s215, 512, %s4, [#allocation9], 128, 128, 8
    $region29: #{tpu_custom_call.1} parent=1 // pred_fallthru
      _
    // Predicated region
    $region30: #{tpu_custom_call.1} parent=1 // pred_check
      _
    $region31: #{tpu_custom_call.1} parent=1 // pred_check_branch
      %222 = sbr.rel (0) target = $region33
    $region32: #{tpu_custom_call.1} parent=1 // pred_region
      %223 = dma.done [#allocation4], 512
    $region33: #{tpu_custom_call.1} parent=1 // pred_fallthru
      _
    // Predicated region
    $region34: #{tpu_custom_call.1} parent=1 // pred_check
      _
    $region35: #{tpu_custom_call.1} parent=1 // pred_check_branch
      %225 = sbr.rel (0) target = $region37
    $region36: #{tpu_custom_call.1} parent=1 // pred_region
      %226 = dma.done [#allocation9], 512
    $region37: #{tpu_custom_call.1} parent=1 // pred_fallthru
      _
    %227 = vsyncpa [#allocation3], 1
    %228 = vsyncpa [#allocation6], 1
    %229 = vsyncpa [#allocation4], 1
    %230 = vsyncpa [#allocation9], 1

</llo_original>
